<compile_context>
chip_gen: v7x
topology: tpu7x:2x2x1
jax: 0.10.0
libtpu: 0.0.40
codegen_flags: <defaults>
</compile_context>

<pallas_src>
import functools

import jax
import jax.numpy as jnp
from jax import lax
from jax.experimental import pallas as pl
from jax.experimental.pallas import tpu as pltpu

HIDDEN = 32
LANES = 128
PACK = LANES // HIDDEN           # 4 hidden vectors packed per 128-lane vreg
MIN_TILE = 512                   # packed rows; ~85% of HBM roofline per sweep
MAX_TILE = 4096                  # packed rows; x+out double-buffered ~= 8 MiB
DROPOUT_RATE = 0.1


def _round_up(a, b):
    return (a + b - 1) // b * b


def _pwff_kernel(seed_ref, x_ref, w1_ref, b1_ref, w2_ref, b2_ref, o_ref,
                 *, dropout_p, tile_rows):
    """One streamed tile: two lane-dense bf16 matmuls, ReLU, dropout, residual."""
    x = x_ref[...]                                               # (tile, 128) f32
    # bf16 operands, f32 accumulation: keeps the 4x-padded block-diag matmul
    # far below MXU roofline -> kernel stays HBM-bound on v5e/v6e/v7x.
    h = jnp.dot(x.astype(jnp.bfloat16), w1_ref[...],
                preferred_element_type=jnp.float32)
    h = jnp.maximum(h + b1_ref[...], 0.0)
    y = jnp.dot(h.astype(jnp.bfloat16), w2_ref[...],
                preferred_element_type=jnp.float32)
    y = y + b2_ref[...]

    if dropout_p > 0.0:
        # Cheap counter-based dropout: linear element id -> 2 muls + 2
        # xorshifts -> low-24-bit integer threshold compare.  Unique per
        # (seed, grid step, element); deterministic for a fixed seed.
        rows = lax.broadcasted_iota(jnp.int32, y.shape, 0)
        cols = lax.broadcasted_iota(jnp.int32, y.shape, 1)
        base = (pl.program_id(0) * jnp.int32(tile_rows * y.shape[1])
                + seed_ref[0] * jnp.int32(0x632BE59B))
        z = rows * jnp.int32(y.shape[1]) + cols + base
        z = z * jnp.int32(-1640531527)                           # 0x9E3779B9 (wraps)
        z = z ^ lax.shift_right_logical(z, 15)
        z = z * jnp.int32(0x27D4EB2D)
        z = z ^ lax.shift_right_logical(z, 16)
        bits24 = z & jnp.int32(0x00FFFFFF)                       # in [0, 2^24)
        thresh = jnp.int32(int(dropout_p * (1 << 24)))
        keep = bits24 >= thresh                                  # integer compare
        y = jnp.where(keep, y * jnp.float32(1.0 / (1.0 - dropout_p)), 0.0)

    o_ref[...] = (y + x).astype(o_ref.dtype)                     # residual (f32 x)


def pack_pwff_params(w1, b1, w2, b2):
    """One-time packing (hoisted out of the hot call path).

    Block-diagonal W^T of shape (128,128) (4 copies of the 32x32 weight, bf16
    for the MXU) and lane-tiled (1,128) f32 biases, so 4 independent hidden
    vectors share one 128-lane vreg.  Per-32-lane-group math is unchanged.
    """
    eye = jnp.eye(PACK, dtype=jnp.float32)
    w1p = jnp.kron(eye, w1.T.astype(jnp.float32)).astype(jnp.bfloat16)  # (128,128)
    w2p = jnp.kron(eye, w2.T.astype(jnp.float32)).astype(jnp.bfloat16)  # (128,128)
    b1p = jnp.tile(b1.reshape(1, HIDDEN), (1, PACK)).astype(jnp.float32)  # (1,128)
    b2p = jnp.tile(b2.reshape(1, HIDDEN), (1, PACK)).astype(jnp.float32)  # (1,128)
    return w1p, b1p, w2p, b2p


def pointwise_feedforward(x, packed_params, *, dropout_p, seed=0):
    """x: (..., HIDDEN) float32.  packed_params: output of pack_pwff_params."""
    w1p, b1p, w2p, b2p = packed_params
    orig_shape = x.shape
    H = orig_shape[-1]
    assert H == HIDDEN, "kernel packing assumes hidden_units == 32"

    x2 = x.reshape(-1, H)
    M = x2.shape[0]

    # Pad only to a multiple of PACK=4 (usually a static no-op since M is
    # batch*seq).  No tile-multiple padding: the grid uses cdiv and Pallas
    # masks the ragged last block, so no full-array pad/slice on the hot path.
    pad = (-M) % PACK
    if pad:
        x2 = jnp.pad(x2, ((0, pad), (0, 0)))
    n_packed = (M + pad) // PACK
    xp = x2.reshape(n_packed, LANES)                        # lane-dense layout

    # Tile selection: big tiles to amortize per-step overhead, capped for v7x
    # VMEM, and >=~8 grid steps on large inputs so the "parallel" axis shards
    # across both v7x TensorCores.
    if n_packed <= MIN_TILE:
        tile = n_packed                       # single full-array block (legal)
    else:
        tile = min(MAX_TILE, max(MIN_TILE, _round_up(-(-n_packed // 8), 8)))
    n_tiles = -(-n_packed // tile)

    seed_arr = jnp.array([seed], dtype=jnp.int32)
    kernel = functools.partial(_pwff_kernel, dropout_p=float(dropout_p),
                               tile_rows=tile)

    grid_spec = pltpu.PrefetchScalarGridSpec(
        num_scalar_prefetch=1,
        grid=(n_tiles,),
        in_specs=[
            pl.BlockSpec((tile, LANES), lambda i, s: (i, 0)),     # x (streamed)
            pl.BlockSpec((LANES, LANES), lambda i, s: (0, 0)),    # W1^T blockdiag (resident)
            pl.BlockSpec((1, LANES), lambda i, s: (0, 0)),        # b1
            pl.BlockSpec((LANES, LANES), lambda i, s: (0, 0)),    # W2^T blockdiag (resident)
            pl.BlockSpec((1, LANES), lambda i, s: (0, 0)),        # b2
        ],
        out_specs=pl.BlockSpec((tile, LANES), lambda i, s: (i, 0)),
    )

    cost = pl.CostEstimate(
        flops=4 * n_packed * LANES * LANES,                       # two matmuls
        transcendentals=0,
        bytes_accessed=(4 * 2 * n_packed * LANES                  # x in + out
                        + 2 * 2 * LANES * LANES                   # bf16 weights
                        + 4 * 2 * LANES),                         # biases
    )

    out = pl.pallas_call(
        kernel,
        out_shape=jax.ShapeDtypeStruct((n_packed, LANES), x.dtype),
        grid_spec=grid_spec,
        compiler_params=pltpu.CompilerParams(
            dimension_semantics=("parallel",)),   # megacore sharding on v7x
        cost_estimate=cost,
    )(seed_arr, xp, w1p, b1p, w2p, b2p)

    out = out.reshape(n_packed * PACK, H)
    if pad:
        out = out[:M]
    return out.reshape(orig_shape)


if __name__ == "__main__":
    key = jax.random.PRNGKey(0)
    k_x, k_w1, k_b1, k_w2, k_b2 = jax.random.split(key, 5)

    B, L, H = 2, 8, HIDDEN
    x = jax.random.normal(k_x, (B, L, H), dtype=jnp.float32)

    # torch.nn.Linear default init: U(-1/sqrt(fan_in), 1/sqrt(fan_in))
    bound = 1.0 / (H ** 0.5)
    w1 = jax.random.uniform(k_w1, (H, H), jnp.float32, -bound, bound)
    b1 = jax.random.uniform(k_b1, (H,), jnp.float32, -bound, bound)
    w2 = jax.random.uniform(k_w2, (H, H), jnp.float32, -bound, bound)
    b2 = jax.random.uniform(k_b2, (H,), jnp.float32, -bound, bound)

    # Pack weights once (hoisted out of the hot call path).
    packed = pack_pwff_params(w1, b1, w2, b2)
    packed = tuple(jax.block_until_ready(p) for p in packed)

    # Correctness vs pure-JAX f32 reference with dropout disabled.  Matmuls
    # run in bf16 with f32 accumulation, so tolerance is loosened accordingly.
    out_nodrop = pointwise_feedforward(x, packed, dropout_p=0.0)
    jax.block_until_ready(out_nodrop)
    h_ref = jnp.maximum(x @ w1.T + b1, 0.0)
    ref = h_ref @ w2.T + b2 + x
    assert jnp.allclose(out_nodrop, ref, atol=2e-2, rtol=2e-2), "mismatch vs reference"

    # Training-mode dropout (deterministic in-kernel counter-hash mask; caller
    # should vary `seed` per step to mimic torch's fresh mask each forward).
    # TODO(synk): torch.nn.Dropout's exact RNG stream cannot be reproduced; a
    # counter-based hash with the same keep probability / scaling is used.
    out = pointwise_feedforward(x, packed, dropout_p=DROPOUT_RATE, seed=42)
    jax.block_until_ready(out)
    assert out.shape == x.shape and out.dtype == x.dtype
    assert bool(jnp.all(jnp.isfinite(out)))
    # Dropped positions collapse to the pure residual (y -> 0, so out == x).
    frac_dropped = float(jnp.mean((out == x).astype(jnp.float32)))
    assert 0.01 < frac_dropped < 0.40, f"dropout fraction looks wrong: {frac_dropped}"

    print("KERNEL_OK")
</pallas_src>

<mosaic_0001>
module attributes {stable_mosaic.version = 11 : i64} {
  func.func @_pwff_kernel(%arg0: i32, %arg1: memref<1xi32, #tpu.memory_space<smem>>, %arg2: memref<4x128xf32, #tpu.memory_space<vmem>>, %arg3: memref<128x128xbf16, #tpu.memory_space<vmem>>, %arg4: memref<1x128xf32, #tpu.memory_space<vmem>>, %arg5: memref<128x128xbf16, #tpu.memory_space<vmem>>, %arg6: memref<1x128xf32, #tpu.memory_space<vmem>>, %arg7: memref<4x128xf32, #tpu.memory_space<vmem>>) attributes {dimension_semantics = [#tpu.dimension_semantics<parallel>], iteration_bounds = array<i64: 1>, scalar_prefetch = 1 : i64, scratch_operands = 0 : i64, tpu.core_type = #tpu.core_type<tc>, window_params = [{transform_indices = @transform_0, window_bounds = array<i64: 4, 128>}, {pipeline_mode = #tpu.pipeline_mode<synchronous>, transform_indices = @transform_1, window_bounds = array<i64: 128, 128>}, {pipeline_mode = #tpu.pipeline_mode<synchronous>, transform_indices = @transform_2, window_bounds = array<i64: 1, 128>}, {pipeline_mode = #tpu.pipeline_mode<synchronous>, transform_indices = @transform_3, window_bounds = array<i64: 128, 128>}, {pipeline_mode = #tpu.pipeline_mode<synchronous>, transform_indices = @transform_4, window_bounds = array<i64: 1, 128>}, {transform_indices = @transform_5, window_bounds = array<i64: 4, 128>}]} {
    %c0 = arith.constant 0 : index
    %c0_0 = arith.constant 0 : index
    %0 = vector.load %arg2[%c0, %c0_0] : memref<4x128xf32, #tpu.memory_space<vmem>>, vector<4x128xf32>
    %1 = arith.truncf %0 : vector<4x128xf32> to vector<4x128xbf16>
    %c0_1 = arith.constant 0 : index
    %c0_2 = arith.constant 0 : index
    %2 = vector.load %arg3[%c0_1, %c0_2] : memref<128x128xbf16, #tpu.memory_space<vmem>>, vector<128x128xbf16>
    %cst = arith.constant dense<0.000000e+00> : vector<4x128xf32>
    %3 = tpu.matmul %1, %2, %cst {dimension_numbers = #tpu.dot_dimension_numbers<[1], [0], [0], [1], [0, 0, 1, 1], [], []>} : vector<4x128xbf16>, vector<128x128xbf16>, vector<4x128xf32> -> vector<4x128xf32>
    %c0_3 = arith.constant 0 : index
    %c0_4 = arith.constant 0 : index
    %4 = vector.load %arg4[%c0_3, %c0_4] : memref<1x128xf32, #tpu.memory_space<vmem>>, vector<1x128xf32>
    %5 = vector.broadcast %4 : vector<1x128xf32> to vector<4x128xf32>
    %6 = arith.addf %3, %5 : vector<4x128xf32>
    %cst_5 = arith.constant 0.000000e+00 : f32
    %7 = vector.broadcast %cst_5 : f32 to vector<4x128xf32>
    %8 = arith.maximumf %6, %7 : vector<4x128xf32>
    %9 = arith.truncf %8 : vector<4x128xf32> to vector<4x128xbf16>
    %c0_6 = arith.constant 0 : index
    %c0_7 = arith.constant 0 : index
    %10 = vector.load %arg5[%c0_6, %c0_7] : memref<128x128xbf16, #tpu.memory_space<vmem>>, vector<128x128xbf16>
    %cst_8 = arith.constant dense<0.000000e+00> : vector<4x128xf32>
    %11 = tpu.matmul %9, %10, %cst_8 {dimension_numbers = #tpu.dot_dimension_numbers<[1], [0], [0], [1], [0, 0, 1, 1], [], []>} : vector<4x128xbf16>, vector<128x128xbf16>, vector<4x128xf32> -> vector<4x128xf32>
    %c0_9 = arith.constant 0 : index
    %c0_10 = arith.constant 0 : index
    %12 = vector.load %arg6[%c0_9, %c0_10] : memref<1x128xf32, #tpu.memory_space<vmem>>, vector<1x128xf32>
    %13 = vector.broadcast %12 : vector<1x128xf32> to vector<4x128xf32>
    %14 = arith.addf %11, %13 : vector<4x128xf32>
    %15 = arith.addf %14, %0 : vector<4x128xf32>
    %c0_11 = arith.constant 0 : index
    %c0_12 = arith.constant 0 : index
    %16 = vector.load %arg7[%c0_11, %c0_12] : memref<4x128xf32, #tpu.memory_space<vmem>>, vector<4x128xf32>
    tpu.vector_store %arg7[%c0_11, %c0_12], %15 {strides = array<i32>} : memref<4x128xf32, #tpu.memory_space<vmem>>, vector<4x128xf32>,
    return
  }
  func.func @transform_0(%arg0: i32, %arg1: memref<1xi32, #tpu.memory_space<smem>>) -> (i32, i32) {
    %c0_i32 = arith.constant 0 : i32
    %c0_i32_0 = arith.constant 0 : i32
    return %arg0, %c0_i32 : i32, i32
  }
  func.func @transform_1(%arg0: i32, %arg1: memref<1xi32, #tpu.memory_space<smem>>) -> (i32, i32) {
    %c0_i32 = arith.constant 0 : i32
    %c0_i32_0 = arith.constant 0 : i32
    %c0_i32_1 = arith.constant 0 : i32
    return %c0_i32, %c0_i32_0 : i32, i32
  }
  func.func @transform_2(%arg0: i32, %arg1: memref<1xi32, #tpu.memory_space<smem>>) -> (i32, i32) {
    %c0_i32 = arith.constant 0 : i32
    %c0_i32_0 = arith.constant 0 : i32
    %c0_i32_1 = arith.constant 0 : i32
    return %c0_i32, %c0_i32_0 : i32, i32
  }
  func.func @transform_3(%arg0: i32, %arg1: memref<1xi32, #tpu.memory_space<smem>>) -> (i32, i32) {
    %c0_i32 = arith.constant 0 : i32
    %c0_i32_0 = arith.constant 0 : i32
    %c0_i32_1 = arith.constant 0 : i32
    return %c0_i32, %c0_i32_0 : i32, i32
  }
  func.func @transform_4(%arg0: i32, %arg1: memref<1xi32, #tpu.memory_space<smem>>) -> (i32, i32) {
    %c0_i32 = arith.constant 0 : i32
    %c0_i32_0 = arith.constant 0 : i32
    %c0_i32_1 = arith.constant 0 : i32
    return %c0_i32, %c0_i32_0 : i32, i32
  }
  func.func @transform_5(%arg0: i32, %arg1: memref<1xi32, #tpu.memory_space<smem>>) -> (i32, i32) {
    %c0_i32 = arith.constant 0 : i32
    %c0_i32_0 = arith.constant 0 : i32
    return %arg0, %c0_i32 : i32, i32
  }
}

</mosaic_0001>

<llo_original>
// kernel: tpu_custom_call.1
$region0: #{tpu_custom_call.1}
  #allocation0 [shape = 'u32[]', space=smem, size = 0x4, offset = 0x4, fixed_abs, tag = 'smem constant byte address 0x4 - core index']
  #allocation1 [shape = 'u32[144,128]{1,0:T(1,128)}', space=vmem, size = 0x12000, scoped, tag = 'internal scratch']
  #allocation2 [shape = 's32[1]{0}', space=sflag, size = 0x4, scoped, tag = 'scoped memory for tpu_custom_call.1']
  #allocation3 [shape = 's32[1]{0:T(128)S(6)}', space=smem, size = 0x200, scoped, tag = 'prefetched SMEM operand 0']
  %s0 = inlined_call_operand.<no memory space> [shape: s32[1], index: 0, kind: input, shape index: {}]
  %s1 = inlined_call_operand.hbm [shape: f32[4,128], index: 1, kind: input, shape index: {}]
  %s2 = inlined_call_operand.hbm [shape: bf16[128,128], index: 2, kind: input, shape index: {}]
  %s3 = inlined_call_operand.vmem [shape: f32[1,128], index: 3, kind: input, shape index: {}]
  %s4 = inlined_call_operand.hbm [shape: bf16[128,128], index: 4, kind: input, shape index: {}]
  %s5 = inlined_call_operand.vmem [shape: f32[1,128], index: 5, kind: input, shape index: {}]
  %s6 = inlined_call_operand.hbm [shape: f32[4,128], index: 6, kind: output, shape index: {}]
  %s7 = sld [smem:[#allocation0]]
  $region42: #{tpu_custom_call.1} parent=0
    _
  %s9 = ssub.s32 1, %s7
  %s10 = scalar_select 0, %s9, %s7
  %11 = sst [smem:[#allocation3]] %s0
  $region1: #{tpu_custom_call.1} parent=0
    #allocation4 [shape = 'u8[2048]{0}', space=vmem, size = 0x800, scoped, tag = 'input window, operand 1, single buffered']
    #allocation5 [shape = 's32[1]{0}', space=sflag, size = 0x4, scoped, tag = 'scoped memory for tpu_custom_call.1']
    #allocation6 [shape = 's32[1]{0}', space=sflag, size = 0x4, scoped, tag = 'scoped memory for tpu_custom_call.1']
    #allocation7 [shape = 'u8[32768]{0}', space=vmem, size = 0x8000, scoped, tag = 'input window, operand 2, single buffered']
    #allocation8 [shape = 's32[1]{0}', space=sflag, size = 0x4, scoped, tag = 'scoped memory for tpu_custom_call.1']
    #allocation9 [shape = 'u8[32768]{0}', space=vmem, size = 0x8000, scoped, tag = 'input window, operand 4, single buffered']
    #allocation10 [shape = 'u8[2048]{0}', space=vmem, size = 0x800, scoped, tag = 'output window, operand 0, single buffered']
    %12 = vsyncpa [#allocation5], 0
    %13 = vsyncpa [#allocation8], 0
    %14 = vsyncpa [#allocation6], 0
    // Predicated region
    $region2: #{tpu_custom_call.1} parent=1 // pred_check
      _
    $region3: #{tpu_custom_call.1} parent=1 // pred_check_branch
      %16 = sbr.rel (0) target = $region5
    $region4: #{tpu_custom_call.1} parent=1 // pred_region
      %s18 = ssub.s32 64, 64
      %19 = vsyncadd [#allocation5], %s18
      %s21 = sshll.u32 [#allocation4], 4
      %s22 = int_to_ptr.vmem [resolvable:$true] %s21
      %24 = dma.hbm_to_vmem [thread:$0]  %s1, 64, %s22, [#allocation5]
    $region5: #{tpu_custom_call.1} parent=1 // pred_fallthru
      _
    // Predicated region
    $region6: #{tpu_custom_call.1} parent=1 // pred_check
      _
    $region7: #{tpu_custom_call.1} parent=1 // pred_check_branch
      %26 = sbr.rel (0) target = $region9
    $region8: #{tpu_custom_call.1} parent=1 // pred_region
      %s28 = ssub.s32 1024, 1024
      %29 = vsyncadd [#allocation8], %s28
      %s30 = sshll.u32 [#allocation7], 4
      %s31 = int_to_ptr.vmem [resolvable:$true] %s30
      %36 = dma.hbm_to_vmem [thread:$0]  %s2, 1024, %s31, [#allocation8], 64, 64, 4
    $region9: #{tpu_custom_call.1} parent=1 // pred_fallthru
      _
    // Predicated region
    $region10: #{tpu_custom_call.1} parent=1 // pred_check
      _
    $region11: #{tpu_custom_call.1} parent=1 // pred_check_branch
      %38 = sbr.rel (0) target = $region13
    $region12: #{tpu_custom_call.1} parent=1 // pred_region
      _
    $region13: #{tpu_custom_call.1} parent=1 // pred_fallthru
      _
    // Predicated region
    $region14: #{tpu_custom_call.1} parent=1 // pred_check
      _
    $region15: #{tpu_custom_call.1} parent=1 // pred_check_branch
      %40 = sbr.rel (0) target = $region17
    $region16: #{tpu_custom_call.1} parent=1 // pred_region
      %s42 = ssub.s32 1024, 1024
      %43 = vsyncadd [#allocation8], %s42
      %s44 = sshll.u32 [#allocation9], 4
      %s45 = int_to_ptr.vmem [resolvable:$true] %s44
      %50 = dma.hbm_to_vmem [thread:$0]  %s4, 1024, %s45, [#allocation8], 64, 64, 4
    $region17: #{tpu_custom_call.1} parent=1 // pred_fallthru
      _
    // Predicated region
    $region18: #{tpu_custom_call.1} parent=1 // pred_check
      _
    $region19: #{tpu_custom_call.1} parent=1 // pred_check_branch
      %52 = sbr.rel (0) target = $region21
    $region20: #{tpu_custom_call.1} parent=1 // pred_region
      _
    $region21: #{tpu_custom_call.1} parent=1 // pred_fallthru
      _
    // Predicated region
    $region22: #{tpu_custom_call.1} parent=1 // pred_check
      _
    $region23: #{tpu_custom_call.1} parent=1 // pred_check_branch
      %54 = sbr.rel (0) target = $region25
    $region24: #{tpu_custom_call.1} parent=1 // pred_region
      %55 = dma.done [#allocation5], 64
    $region25: #{tpu_custom_call.1} parent=1 // pred_fallthru
      _
    // Predicated region
    $region26: #{tpu_custom_call.1} parent=1 // pred_check
      _
    $region27: #{tpu_custom_call.1} parent=1 // pred_check_branch
      %57 = sbr.rel (0) target = $region29
    $region28: #{tpu_custom_call.1} parent=1 // pred_region
      %58 = dma.done [#allocation8], 1024
    $region29: #{tpu_custom_call.1} parent=1 // pred_fallthru
      _
    // Predicated region
    $region30: #{tpu_custom_call.1} parent=1 // pred_check
      _
    $region31: #{tpu_custom_call.1} parent=1 // pred_check_branch
      %60 = sbr.rel (0) target = $region33
    $region32: #{tpu_custom_call.1} parent=1 // pred_region
      %61 = dma.done [#allocation8], 1024
    $region33: #{tpu_custom_call.1} parent=1 // pred_fallthru
      _
    %v63 = vld [vmem:[#allocation4] sm:$0xf]
    %v64 = vpack.c.bf16 %v63, %v63
    %v65 = vld [vmem:[#allocation7] sm:$0xf]
    %v66 = vld [vmem:[#allocation7 + $0x4] sm:$0xf]
    %v67 = vld [vmem:[#allocation7 + $0x8] sm:$0xf]
    %v68 = vld [vmem:[#allocation7 + $0xc] sm:$0xf]
    %v69 = vld [vmem:[#allocation7 + $0x10] sm:$0xf]
    %v70 = vld [vmem:[#allocation7 + $0x14] sm:$0xf]
    %v71 = vld [vmem:[#allocation7 + $0x18] sm:$0xf]
    %v72 = vld [vmem:[#allocation7 + $0x1c] sm:$0xf]
    %v73 = vld [vmem:[#allocation7 + $0x20] sm:$0xf]
    %v74 = vld [vmem:[#allocation7 + $0x24] sm:$0xf]
    %v75 = vld [vmem:[#allocation7 + $0x28] sm:$0xf]
    %v76 = vld [vmem:[#allocation7 + $0x2c] sm:$0xf]
    %v77 = vld [vmem:[#allocation7 + $0x30] sm:$0xf]
    %v78 = vld [vmem:[#allocation7 + $0x34] sm:$0xf]
    %v79 = vld [vmem:[#allocation7 + $0x38] sm:$0xf]
    %v80 = vld [vmem:[#allocation7 + $0x3c] sm:$0xf]
    %v81 = vld [vmem:[%s3] sm:$0x1]
    %v83 = vlaneseq
    %v84 = vshrl.u32 %v83, 7
    %v85 = vsub.s32 0, %v84
    %v86 = vrot.slane %v81, %v85
    %v104 = vunpack.c.l.b16 %v65
    %v105 = vunpack.c.l.b16 %v66
    %v106 = vunpack.c.l.b16 %v67
    %v107 = vunpack.c.l.b16 %v68
    %v108 = vunpack.c.l.b16 %v69
    %v109 = vunpack.c.l.b16 %v70
    %v110 = vunpack.c.l.b16 %v71
    %v111 = vunpack.c.l.b16 %v72
    %v112 = vunpack.c.l.b16 %v73
    %v113 = vunpack.c.l.b16 %v74
    %v114 = vunpack.c.l.b16 %v75
    %v115 = vunpack.c.l.b16 %v76
    %v116 = vunpack.c.l.b16 %v77
    %v117 = vunpack.c.l.b16 %v78
    %v118 = vunpack.c.l.b16 %v79
    %v119 = vunpack.c.l.b16 %v80
    %v120 = vpack.c.b16 %v105, %v104
    %v121 = vpack.c.b16 %v107, %v106
    %v122 = vpack.c.b16 %v109, %v108
    %v123 = vpack.c.b16 %v111, %v110
    %v124 = vpack.c.b16 %v113, %v112
    %v125 = vpack.c.b16 %v115, %v114
    %v126 = vpack.c.b16 %v117, %v116
    %v127 = vpack.c.b16 %v119, %v118
    %136 = vmatprep.subr.bf16.mxu0 0
    %137 = vmatpush1.bf16.msra.mxu0 %v120
    %138 = vmatprep.subr.bf16.mxu0 0
    %139 = vmatpush1.bf16.msra.mxu0 %v121
    %140 = vmatprep.subr.bf16.mxu0 0
    %141 = vmatpush1.bf16.msra.mxu0 %v122
    %142 = vmatprep.subr.bf16.mxu0 0
    %143 = vmatpush1.bf16.msra.mxu0 %v123
    %144 = vmatprep.subr.bf16.mxu0 0
    %145 = vmatpush1.bf16.msra.mxu0 %v124
    %146 = vmatprep.subr.bf16.mxu0 0
    %147 = vmatpush1.bf16.msra.mxu0 %v125
    %148 = vmatprep.subr.bf16.mxu0 0
    %149 = vmatpush1.bf16.msra.mxu0 %v126
    %150 = vmatprep.subr.bf16.mxu0 0
    %151 = vmatpush1.bf16.msra.mxu0 %v127
    %152 = vmatprep.subr.bf16.mxu0 0
    %153 = vmatpush1.bf16.msra.mxu0 0
    %154 = vmatprep.subr.bf16.mxu0 0
    %155 = vmatpush1.bf16.msra.mxu0 0
    %156 = vmatprep.subr.bf16.mxu0 0
    %157 = vmatpush1.bf16.msra.mxu0 0
    %158 = vmatprep.subr.bf16.mxu0 0
    %159 = vmatpush1.bf16.msra.mxu0 0
    %160 = vmatprep.subr.bf16.mxu0 0
    %161 = vmatpush1.bf16.msra.mxu0 0
    %162 = vmatprep.subr.bf16.mxu0 0
    %163 = vmatpush1.bf16.msra.mxu0 0
    %164 = vmatprep.subr.bf16.mxu0 0
    %165 = vmatpush1.bf16.msra.mxu0 0
    %166 = vmatprep.subr.bf16.mxu0 0
    %167 = vmatpush1.bf16.msra.mxu0 0
    %168 = vmatprep.mubr.bf16.mxu0 0
    %169 = vmatmul.mubr.bf16.gmra.mrb[0].mxu0 %v64
    %v170 = vpop.f32.mrb[0].mxu0
    %v171 = vadd.f32 %v86, %v170
    %v172 = vpop.f32.mrb[0].mxu0
    %v173 = vpop.f32.mrb[0].mxu0
    %v174 = vpop.f32.mrb[0].mxu0
    %175 = vdwg.mxu0
    %v176 = vmax.f32 %v171, 0.0
    %v177 = vpack.c.bf16 %v176, %v176
    %v178 = vld [vmem:[#allocation9] sm:$0xf]
    %v179 = vld [vmem:[#allocation9 + $0x4] sm:$0xf]
    %v180 = vld [vmem:[#allocation9 + $0x8] sm:$0xf]
    %v181 = vld [vmem:[#allocation9 + $0xc] sm:$0xf]
    %v182 = vld [vmem:[#allocation9 + $0x10] sm:$0xf]
    %v183 = vld [vmem:[#allocation9 + $0x14] sm:$0xf]
    %v184 = vld [vmem:[#allocation9 + $0x18] sm:$0xf]
    %v185 = vld [vmem:[#allocation9 + $0x1c] sm:$0xf]
    %v186 = vld [vmem:[#allocation9 + $0x20] sm:$0xf]
    %v187 = vld [vmem:[#allocation9 + $0x24] sm:$0xf]
    %v188 = vld [vmem:[#allocation9 + $0x28] sm:$0xf]
    %v189 = vld [vmem:[#allocation9 + $0x2c] sm:$0xf]
    %v190 = vld [vmem:[#allocation9 + $0x30] sm:$0xf]
    %v191 = vld [vmem:[#allocation9 + $0x34] sm:$0xf]
    %v192 = vld [vmem:[#allocation9 + $0x38] sm:$0xf]
    %v193 = vld [vmem:[#allocation9 + $0x3c] sm:$0xf]
    %v194 = vld [vmem:[%s5] sm:$0x1]
    %v196 = vlaneseq
    %v197 = vshrl.u32 %v196, 7
    %v198 = vsub.s32 0, %v197
    %v199 = vrot.slane %v194, %v198
    %v217 = vunpack.c.l.b16 %v178
    %v218 = vunpack.c.l.b16 %v179
    %v219 = vunpack.c.l.b16 %v180
    %v220 = vunpack.c.l.b16 %v181
    %v221 = vunpack.c.l.b16 %v182
    %v222 = vunpack.c.l.b16 %v183
    %v223 = vunpack.c.l.b16 %v184
    %v224 = vunpack.c.l.b16 %v185
    %v225 = vunpack.c.l.b16 %v186
    %v226 = vunpack.c.l.b16 %v187
    %v227 = vunpack.c.l.b16 %v188
    %v228 = vunpack.c.l.b16 %v189
    %v229 = vunpack.c.l.b16 %v190
    %v230 = vunpack.c.l.b16 %v191
    %v231 = vunpack.c.l.b16 %v192
    %v232 = vunpack.c.l.b16 %v193
    %v233 = vpack.c.b16 %v218, %v217
    %v234 = vpack.c.b16 %v220, %v219
    %v235 = vpack.c.b16 %v222, %v221
    %v236 = vpack.c.b16 %v224, %v223
    %v237 = vpack.c.b16 %v226, %v225
    %v238 = vpack.c.b16 %v228, %v227
    %v239 = vpack.c.b16 %v230, %v229
    %v240 = vpack.c.b16 %v232, %v231
    %249 = vmatprep.subr.bf16.mxu0 0
    %250 = vmatpush1.bf16.msra.mxu0 %v233
    %251 = vmatprep.subr.bf16.mxu0 0
    %252 = vmatpush1.bf16.msra.mxu0 %v234
    %253 = vmatprep.subr.bf16.mxu0 0
    %254 = vmatpush1.bf16.msra.mxu0 %v235
    %255 = vmatprep.subr.bf16.mxu0 0
    %256 = vmatpush1.bf16.msra.mxu0 %v236
    %257 = vmatprep.subr.bf16.mxu0 0
    %258 = vmatpush1.bf16.msra.mxu0 %v237
    %259 = vmatprep.subr.bf16.mxu0 0
    %260 = vmatpush1.bf16.msra.mxu0 %v238
    %261 = vmatprep.subr.bf16.mxu0 0
    %262 = vmatpush1.bf16.msra.mxu0 %v239
    %263 = vmatprep.subr.bf16.mxu0 0
    %264 = vmatpush1.bf16.msra.mxu0 %v240
    %265 = vmatprep.subr.bf16.mxu0 0
    %266 = vmatpush1.bf16.msra.mxu0 0
    %267 = vmatprep.subr.bf16.mxu0 0
    %268 = vmatpush1.bf16.msra.mxu0 0
    %269 = vmatprep.subr.bf16.mxu0 0
    %270 = vmatpush1.bf16.msra.mxu0 0
    %271 = vmatprep.subr.bf16.mxu0 0
    %272 = vmatpush1.bf16.msra.mxu0 0
    %273 = vmatprep.subr.bf16.mxu0 0
    %274 = vmatpush1.bf16.msra.mxu0 0
    %275 = vmatprep.subr.bf16.mxu0 0
    %276 = vmatpush1.bf16.msra.mxu0 0
    %277 = vmatprep.subr.bf16.mxu0 0
    %278 = vmatpush1.bf16.msra.mxu0 0
    %279 = vmatprep.subr.bf16.mxu0 0
    %280 = vmatpush1.bf16.msra.mxu0 0
    %281 = vmatprep.mubr.bf16.mxu0 0
    %282 = vmatmul.mubr.bf16.gmra.mrb[0].mxu0 %v177
    %v283 = vpop.f32.mrb[0].mxu0
    %v284 = vadd.f32 %v199, %v283
    %v285 = vpop.f32.mrb[0].mxu0
    %v286 = vpop.f32.mrb[0].mxu0
    %v287 = vpop.f32.mrb[0].mxu0
    %288 = vdwg.mxu0
    %v289 = vadd.f32 %v284, %v63
    %290 = vst [vmem:[#allocation10] sm:$0xf] %v289
    // Predicated region
    $region34: #{tpu_custom_call.1} parent=1 // pred_check
      _
    $region35: #{tpu_custom_call.1} parent=1 // pred_check_branch
      %292 = sbr.rel (0) target = $region37
    $region36: #{tpu_custom_call.1} parent=1 // pred_region
      %s294 = ssub.s32 64, 64
      %295 = vsyncadd [#allocation6], %s294
      %s297 = sshll.u32 [#allocation10], 4
      %s298 = int_to_ptr.vmem [resolvable:$true] %s297
      %300 = dma.vmem_to_hbm [thread:$0]  %s298, 64, %s6, [#allocation6]
    $region37: #{tpu_custom_call.1} parent=1 // pred_fallthru
      _
    // Predicated region
    $region38: #{tpu_custom_call.1} parent=1 // pred_check
      _
    $region39: #{tpu_custom_call.1} parent=1 // pred_check_branch
      %302 = sbr.rel (0) target = $region41
    $region40: #{tpu_custom_call.1} parent=1 // pred_region
      %303 = dma.done [#allocation6], 64
    $region41: #{tpu_custom_call.1} parent=1 // pred_fallthru
      _
    %304 = vsyncpa [#allocation5], 1
    %305 = vsyncpa [#allocation8], 1
    %306 = vsyncpa [#allocation6], 1

</llo_original>
